<compile_context>
chip_gen: v5e
topology: v5e:2x2
jax: 0.10.0
libtpu: 0.0.40
codegen_flags: <defaults>
</compile_context>

<pallas_src>
import math

import numpy as np
import jax
import jax.numpy as jnp
from jax import lax
from jax.experimental import pallas as pl
from jax.experimental.pallas import tpu as pltpu

NBF_PER_ATOM = 4
BASIS2 = np.array([0.5, 0.4, 0.3, 0.2], dtype=np.float64)  # torch `basis2`
NBF = 8                                                    # basis2 twice
NN = NBF * NBF
N_SCF_ITERS = 20                                           # fixed loop in `everything`
N_SQUARINGS = 12                                           # projector power iterations
NDOCC = 1

try:                                    # vectorized erf for the Boys function
    from scipy.special import erf as _erf_vec
except Exception:                       # pragma: no cover - scipy-less fallback
    _erf_vec = np.vectorize(math.erf)


# --------------------------------------------------------------------------
# Host-side integral setup (plain numpy glue, float64), equivalent to the
# missing helpers nuclear_repulsion / vectorized_oei / vectorized_tei /
# orthogonalizer for s-type Gaussian primitives.
# --------------------------------------------------------------------------
def _boys0(x):
    x = np.asarray(x, dtype=np.float64)
    safe = np.maximum(x, 1e-12)
    big = 0.5 * np.sqrt(np.pi / safe) * _erf_vec(np.sqrt(safe))
    small = 1.0 - x / 3.0
    return np.where(x < 1e-11, small, big)


def _build_integrals(geom_np):
    exps = np.concatenate([BASIS2, BASIS2])                          # full_basis
    centers = np.concatenate(
        [np.repeat(geom_np[0:1], NBF_PER_ATOM, axis=0),
         np.repeat(geom_np[1:2], NBF_PER_ATOM, axis=0)], axis=0)
    charges = np.array([1.0, 1.0], dtype=np.float64)
    nbf = exps.shape[0]
    norm = (2.0 * exps / np.pi) ** 0.75

    # ---- one-electron integrals (S, T, V) ----
    aa = exps[:, None]; bb = exps[None, :]
    na = norm[:, None]; nb = norm[None, :]
    A = centers[:, None, :]; B = centers[None, :, :]
    p = aa + bb
    mu = aa * bb / p
    AB2 = np.sum((A - B) ** 2, axis=-1)
    S = na * nb * (np.pi / p) ** 1.5 * np.exp(-mu * AB2)
    T = S * mu * (3.0 - 2.0 * mu * AB2)
    P = (aa[..., None] * A + bb[..., None] * B) / p[..., None]
    V = np.zeros((nbf, nbf), dtype=np.float64)
    for at in range(geom_np.shape[0]):
        PC2 = np.sum((P - geom_np[at][None, None, :]) ** 2, axis=-1)
        V += (-charges[at]) * na * nb * (2.0 * np.pi / p) \
             * np.exp(-mu * AB2) * _boys0(p * PC2)

    # ---- two-electron integrals G[p,q,r,s] = (pq|rs) ----
    a = exps[:, None, None, None]; b = exps[None, :, None, None]
    c = exps[None, None, :, None]; d = exps[None, None, None, :]
    Na = norm[:, None, None, None]; Nb = norm[None, :, None, None]
    Nc = norm[None, None, :, None]; Nd = norm[None, None, None, :]
    Ac = centers[:, None, None, None, :]; Bc = centers[None, :, None, None, :]
    Cc = centers[None, None, :, None, :]; Dc = centers[None, None, None, :, :]
    zab = a + b; zcd = c + d; zs = zab + zcd
    AB2e = np.sum((Ac - Bc) ** 2, axis=-1)
    CD2e = np.sum((Cc - Dc) ** 2, axis=-1)
    Pe = (a[..., None] * Ac + b[..., None] * Bc) / zab[..., None]
    Qe = (c[..., None] * Cc + d[..., None] * Dc) / zcd[..., None]
    PQ2 = np.sum((Pe - Qe) ** 2, axis=-1)
    G = (Na * Nb * Nc * Nd * 2.0 * np.pi ** 2.5 / (zab * zcd * np.sqrt(zs))
         * np.exp(-(a * b / zab) * AB2e - (c * d / zcd) * CD2e)
         * _boys0(zab * zcd / zs * PQ2))

    Enuc = charges[0] * charges[1] / np.linalg.norm(geom_np[0] - geom_np[1])

    # orthogonalizer A = S^{-1/2} (Lowdin)
    evals, evecs = np.linalg.eigh(S)
    A_orth = (evecs * (evals ** -0.5)[None, :]) @ evecs.T

    H = T + V
    return H, A_orth, G, Enuc


# --------------------------------------------------------------------------
# Single fused Pallas kernel: the full 20-iteration SCF loop.
# --------------------------------------------------------------------------
def _rhf_scf_kernel(gjk_ref, ha_ref, e_ref):
    f32 = jnp.float32
    n = NBF
    nn = NN

    gjk = gjk_ref[...]                       # (64,128) = [Gj | Gk], row index = 8r+s
    H = ha_ref[0:n, :]                       # (8,8)
    A = ha_ref[n:2 * n, :]                   # (8,8)

    # ---- constant masks, generated in-kernel once (hoisted above SCF loop) --
    r_nn = lax.broadcasted_iota(jnp.int32, (n, n), 0)
    c_nn = lax.broadcasted_iota(jnp.int32, (n, n), 1)
    eye = (r_nn == c_nn).astype(f32)
    ones8 = jnp.ones((n, n), f32)

    i_row = lax.broadcasted_iota(jnp.int32, (n, nn), 0)
    k_col = lax.broadcasted_iota(jnp.int32, (n, nn), 1)
    rowsel = ((k_col >> 3) == i_row).astype(f32)      # rowsel[i, 8r+s] = (r == i)
    colsel = ((k_col & 7) == i_row).astype(f32)       # colsel[i, 8r+s] = (s == i)

    k_al = lax.broadcasted_iota(jnp.int32, (nn, n), 0)
    j_al = lax.broadcasted_iota(jnp.int32, (nn, n), 1)
    align = ((k_al & 7) == j_al).astype(f32)          # align[8r+s, j] = (s == j)

    def mm(a, b):
        return jnp.dot(a, b, preferred_element_type=f32)

    def full_sum(m):                                  # -> (1,1)
        return jnp.sum(jnp.sum(m, axis=1, keepdims=True), axis=0, keepdims=True)

    def scf_body(_, carry):
        d_flat, _e = carry                            # (8,64) replicated vec(D), (1,1)

        # J/K contraction: one MXU matmul against [Gj | Gk]; keep 2J-K flat and
        # unflatten once.
        jk = mm(d_flat, gjk)                          # (8,128), rows identical
        veff_flat = 2.0 * jk[:, :nn] - jk[:, nn:]     # vec(2J - K), replicated
        veff = mm(rowsel * veff_flat, align)          # (8,8)  2J - K
        F = H + veff
        Fp = mm(A, mm(F, A))                          # A F A

        # ---- lowest-eigenpair projector (replaces torch.symeig) -------------
        # B = sigma*I - Fp with sigma = ||Fp||_F >= lambda_max, so the dominant
        # eigenvector of B is the lowest eigenvector of Fp.  Repeated squaring
        # with trace normalization drives X -> v_min v_min^T.
        # TODO(synk): assumes a non-degenerate lowest eigenvalue (true for this
        # H2 test case); a degenerate HOMO would average the degenerate pair.
        fro2 = full_sum(Fp * Fp)                      # ||Fp||_F^2   (1,1)
        sigma = jnp.sqrt(fro2)
        x = sigma * eye - Fp
        for _s in range(N_SQUARINGS):                 # unrolled serial chain
            s2 = full_sum(x * x)                      # = tr(x @ x) (x symmetric);
            y = mm(x, x)                              #   overlaps the MXU matmul
            x = y * pl.reciprocal(s2, approx=True)
        tr = full_sum(x * eye)
        dp = x / tr                                   # projector, tr = NDOCC = 1
        d_ao = mm(A, mm(dp, A))                       # D = A C2occ C2occ^T A

        # Electronic energy: torch uses F built from the OLD density and the
        # NEW density -> same ordering here.
        e_new = full_sum((F + H) * d_ao)              # (1,1)

        # Flatten D into the lane-dense row-replicated vec(D) layout.
        tmp = mm(d_ao, colsel)                        # tmp[r, 8r'+s] = D[r, s]
        d_new = mm(ones8, rowsel * tmp)               # every row = vec(D)

        return d_new, e_new

    d0 = jnp.zeros((n, nn), f32)                      # D = 0 start, flattened
    e0 = jnp.zeros((1, 1), f32)
    _d, e_fin = lax.fori_loop(0, N_SCF_ITERS, scf_body, (d0, e0))
    # Lane-dense single store of the final electronic energy.
    e_ref[...] = jnp.zeros((n, 128), f32) + e_fin


_VMEM_SPEC = pl.BlockSpec(memory_space=pltpu.MemorySpace.VMEM)


@jax.jit
def _scf_pallas(gjk, ha):
    e_slab = pl.pallas_call(
        _rhf_scf_kernel,
        out_shape=jax.ShapeDtypeStruct((NBF, 128), jnp.float32),
        in_specs=[_VMEM_SPEC, _VMEM_SPEC],
        out_specs=_VMEM_SPEC,
    )(gjk, ha)
    return e_slab[0, 0]


def rhf_forward(geom):
    """Equivalent of RHF.forward(geom): returns the SCF energy after the fixed
    20-iteration loop in `everything` (checkpointing is backward-only)."""
    # TODO(synk): host integral generation stays in float64 numpy; the SCF hot
    # path runs in float32 in-kernel (Pallas TPU has no f64), so agreement with
    # a float64 torch.symeig reference is at the ~1e-5 Hartree level.
    geom_np = np.asarray(jax.device_get(geom), dtype=np.float64)
    H, A, G, Enuc = _build_integrals(geom_np)
    n = H.shape[0]
    nn = n * n
    # Pack both contractions as one lane-dense (64,128) matmul operand:
    #   Gj[8r+s, 8p+q] = G[p,q,r,s]   (J = 'pqrs,rs->pq')
    #   Gk[8r+s, 8p+q] = G[p,r,q,s]   (K = 'prqs,rs->pq')
    Gj = np.transpose(G, (2, 3, 0, 1)).reshape(nn, nn)
    Gk = np.transpose(G, (1, 3, 0, 2)).reshape(nn, nn)
    GJK = np.concatenate([Gj, Gk], axis=1).astype(np.float32)        # (64,128)
    HA = np.concatenate([H, A], axis=0).astype(np.float32)           # (16, 8)

    e_elec = _scf_pallas(jnp.asarray(GJK), jnp.asarray(HA))
    return e_elec + jnp.float32(Enuc)


if __name__ == "__main__":
    key = jax.random.PRNGKey(0)
    base = jnp.array([[0.0, 0.0, -0.849220457955],
                      [0.0, 0.0, 0.849220457955]], dtype=jnp.float32)
    geom = base + 0.05 * jax.random.normal(key, (2, 3), dtype=jnp.float32)
    e_scf = rhf_forward(geom)
    jax.block_until_ready(e_scf)
    print("KERNEL_OK")
</pallas_src>

<mosaic_0001>
module attributes {stable_mosaic.version = 11 : i64} {
  func.func @_rhf_scf_kernel(%arg0: memref<64x128xf32, #tpu.memory_space<vmem>>, %arg1: memref<16x8xf32, #tpu.memory_space<vmem>>, %arg2: memref<8x128xf32, #tpu.memory_space<vmem>>) attributes {dimension_semantics = [], scalar_prefetch = 0 : i64, scratch_operands = 0 : i64, tpu.core_type = #tpu.core_type<tc>} {
    %c0 = arith.constant 0 : index
    %c0_0 = arith.constant 0 : index
    %0 = vector.load %arg0[%c0, %c0_0] : memref<64x128xf32, #tpu.memory_space<vmem>>, vector<64x128xf32>
    %c0_1 = arith.constant 0 : index
    %c0_2 = arith.constant 0 : index
    %1 = vector.load %arg1[%c0_1, %c0_2] : memref<16x8xf32, #tpu.memory_space<vmem>>, vector<8x8xf32>
    %c8 = arith.constant 8 : index
    %c0_3 = arith.constant 0 : index
    %2 = vector.load %arg1[%c8, %c0_3] : memref<16x8xf32, #tpu.memory_space<vmem>>, vector<8x8xf32>
    %3 = tpu.iota {dimensions = array<i32: 0>} : vector<8x8xi32>
    %4 = tpu.iota {dimensions = array<i32: 1>} : vector<8x8xi32>
    %5 = arith.cmpi eq, %3, %4 : vector<8x8xi32>
    %6 = arith.extui %5 : vector<8x8xi1> to vector<8x8xi32>
    %7 = arith.sitofp %6 : vector<8x8xi32> to vector<8x8xf32>
    %cst = arith.constant 1.000000e+00 : f32
    %8 = vector.broadcast %cst : f32 to vector<8x8xf32>
    %9 = tpu.iota {dimensions = array<i32: 0>} : vector<8x64xi32>
    %10 = tpu.iota {dimensions = array<i32: 1>} : vector<8x64xi32>
    %c3_i32 = arith.constant 3 : i32
    %11 = vector.broadcast %c3_i32 : i32 to vector<8x64xi32>
    %12 = arith.shrsi %10, %11 : vector<8x64xi32>
    %13 = arith.cmpi eq, %12, %9 : vector<8x64xi32>
    %14 = arith.extui %13 : vector<8x64xi1> to vector<8x64xi32>
    %15 = arith.sitofp %14 : vector<8x64xi32> to vector<8x64xf32>
    %c7_i32 = arith.constant 7 : i32
    %16 = vector.broadcast %c7_i32 : i32 to vector<8x64xi32>
    %17 = arith.andi %10, %16 : vector<8x64xi32>
    %18 = arith.cmpi eq, %17, %9 : vector<8x64xi32>
    %19 = arith.extui %18 : vector<8x64xi1> to vector<8x64xi32>
    %20 = arith.sitofp %19 : vector<8x64xi32> to vector<8x64xf32>
    %21 = tpu.iota {dimensions = array<i32: 0>} : vector<64x8xi32>
    %22 = tpu.iota {dimensions = array<i32: 1>} : vector<64x8xi32>
    %c7_i32_4 = arith.constant 7 : i32
    %23 = vector.broadcast %c7_i32_4 : i32 to vector<64x8xi32>
    %24 = arith.andi %21, %23 : vector<64x8xi32>
    %25 = arith.cmpi eq, %24, %22 : vector<64x8xi32>
    %26 = arith.extui %25 : vector<64x8xi1> to vector<64x8xi32>
    %27 = arith.sitofp %26 : vector<64x8xi32> to vector<64x8xf32>
    %cst_5 = arith.constant 0.000000e+00 : f32
    %28 = vector.broadcast %cst_5 : f32 to vector<8x64xf32>
    %cst_6 = arith.constant 0.000000e+00 : f32
    %29 = vector.broadcast %cst_6 : f32 to vector<1x1xf32>
    %c0_i32 = arith.constant 0 : i32
    %c20_i32 = arith.constant 20 : i32
    %30 = arith.addi %c0_i32, %c20_i32 : i32
    %c1_i32 = arith.constant 1 : i32
    %31:2 = scf.for %arg3 = %c0_i32 to %30 step %c1_i32 iter_args(%arg4 = %28, %arg5 = %29) -> (vector<8x64xf32>, vector<1x1xf32>)  : i32 {
      %cst_10 = arith.constant dense<0.000000e+00> : vector<8x128xf32>
      %36 = tpu.matmul %arg4, %0, %cst_10 {dimension_numbers = #tpu.dot_dimension_numbers<[1], [0], [0], [1], [0, 0, 1, 1], [], []>} : vector<8x64xf32>, vector<64x128xf32>, vector<8x128xf32> -> vector<8x128xf32>
      %37 = vector.extract_strided_slice %36 {offsets = [0, 0], sizes = [8, 64], strides = [1, 1]} : vector<8x128xf32> to vector<8x64xf32>
      %cst_11 = arith.constant 2.000000e+00 : f32
      %38 = vector.broadcast %cst_11 : f32 to vector<8x64xf32>
      %39 = arith.mulf %38, %37 : vector<8x64xf32>
      %40 = vector.extract_strided_slice %36 {offsets = [0, 64], sizes = [8, 64], strides = [1, 1]} : vector<8x128xf32> to vector<8x64xf32>
      %41 = arith.subf %39, %40 : vector<8x64xf32>
      %42 = arith.mulf %15, %41 : vector<8x64xf32>
      %cst_12 = arith.constant dense<0.000000e+00> : vector<8x8xf32>
      %43 = tpu.matmul %42, %27, %cst_12 {dimension_numbers = #tpu.dot_dimension_numbers<[1], [0], [0], [1], [0, 0, 1, 1], [], []>} : vector<8x64xf32>, vector<64x8xf32>, vector<8x8xf32> -> vector<8x8xf32>
      %44 = arith.addf %1, %43 : vector<8x8xf32>
      %cst_13 = arith.constant dense<0.000000e+00> : vector<8x8xf32>
      %45 = tpu.matmul %44, %2, %cst_13 {dimension_numbers = #tpu.dot_dimension_numbers<[1], [0], [0], [1], [0, 0, 1, 1], [], []>} : vector<8x8xf32>, vector<8x8xf32>, vector<8x8xf32> -> vector<8x8xf32>
      %cst_14 = arith.constant dense<0.000000e+00> : vector<8x8xf32>
      %46 = tpu.matmul %2, %45, %cst_14 {dimension_numbers = #tpu.dot_dimension_numbers<[1], [0], [0], [1], [0, 0, 1, 1], [], []>} : vector<8x8xf32>, vector<8x8xf32>, vector<8x8xf32> -> vector<8x8xf32>
      %47 = arith.mulf %46, %46 : vector<8x8xf32>
      %cst_15 = arith.constant dense<0.000000e+00> : vector<8xf32>
      %48 = vector.multi_reduction <add>, %47, %cst_15 [1] : vector<8x8xf32> to vector<8xf32>
      %49 = vector.shape_cast %48 : vector<8xf32> to vector<8x1xf32>
      %cst_16 = arith.constant dense<0.000000e+00> : vector<1xf32>
      %50 = vector.multi_reduction <add>, %49, %cst_16 [0] : vector<8x1xf32> to vector<1xf32>
      %51 = vector.shape_cast %50 : vector<1xf32> to vector<1x1xf32>
      %52 = math.sqrt %51 : vector<1x1xf32>
      %53 = vector.broadcast %52 : vector<1x1xf32> to vector<8x8xf32>
      %54 = arith.mulf %53, %7 : vector<8x8xf32>
      %55 = arith.subf %54, %46 : vector<8x8xf32>
      %56 = arith.mulf %55, %55 : vector<8x8xf32>
      %cst_17 = arith.constant dense<0.000000e+00> : vector<8xf32>
      %57 = vector.multi_reduction <add>, %56, %cst_17 [1] : vector<8x8xf32> to vector<8xf32>
      %58 = vector.shape_cast %57 : vector<8xf32> to vector<8x1xf32>
      %cst_18 = arith.constant dense<0.000000e+00> : vector<1xf32>
      %59 = vector.multi_reduction <add>, %58, %cst_18 [0] : vector<8x1xf32> to vector<1xf32>
      %60 = vector.shape_cast %59 : vector<1xf32> to vector<1x1xf32>
      %cst_19 = arith.constant dense<0.000000e+00> : vector<8x8xf32>
      %61 = tpu.matmul %55, %55, %cst_19 {dimension_numbers = #tpu.dot_dimension_numbers<[1], [0], [0], [1], [0, 0, 1, 1], [], []>} : vector<8x8xf32>, vector<8x8xf32>, vector<8x8xf32> -> vector<8x8xf32>
      %62 = tpu.reciprocal %60 {approx = true} : vector<1x1xf32> -> vector<1x1xf32>
      %63 = vector.broadcast %62 : vector<1x1xf32> to vector<8x8xf32>
      %64 = arith.mulf %61, %63 : vector<8x8xf32>
      %65 = arith.mulf %64, %64 : vector<8x8xf32>
      %cst_20 = arith.constant dense<0.000000e+00> : vector<8xf32>
      %66 = vector.multi_reduction <add>, %65, %cst_20 [1] : vector<8x8xf32> to vector<8xf32>
      %67 = vector.shape_cast %66 : vector<8xf32> to vector<8x1xf32>
      %cst_21 = arith.constant dense<0.000000e+00> : vector<1xf32>
      %68 = vector.multi_reduction <add>, %67, %cst_21 [0] : vector<8x1xf32> to vector<1xf32>
      %69 = vector.shape_cast %68 : vector<1xf32> to vector<1x1xf32>
      %cst_22 = arith.constant dense<0.000000e+00> : vector<8x8xf32>
      %70 = tpu.matmul %64, %64, %cst_22 {dimension_numbers = #tpu.dot_dimension_numbers<[1], [0], [0], [1], [0, 0, 1, 1], [], []>} : vector<8x8xf32>, vector<8x8xf32>, vector<8x8xf32> -> vector<8x8xf32>
      %71 = tpu.reciprocal %69 {approx = true} : vector<1x1xf32> -> vector<1x1xf32>
      %72 = vector.broadcast %71 : vector<1x1xf32> to vector<8x8xf32>
      %73 = arith.mulf %70, %72 : vector<8x8xf32>
      %74 = arith.mulf %73, %73 : vector<8x8xf32>
      %cst_23 = arith.constant dense<0.000000e+00> : vector<8xf32>
      %75 = vector.multi_reduction <add>, %74, %cst_23 [1] : vector<8x8xf32> to vector<8xf32>
      %76 = vector.shape_cast %75 : vector<8xf32> to vector<8x1xf32>
      %cst_24 = arith.constant dense<0.000000e+00> : vector<1xf32>
      %77 = vector.multi_reduction <add>, %76, %cst_24 [0] : vector<8x1xf32> to vector<1xf32>
      %78 = vector.shape_cast %77 : vector<1xf32> to vector<1x1xf32>
      %cst_25 = arith.constant dense<0.000000e+00> : vector<8x8xf32>
      %79 = tpu.matmul %73, %73, %cst_25 {dimension_numbers = #tpu.dot_dimension_numbers<[1], [0], [0], [1], [0, 0, 1, 1], [], []>} : vector<8x8xf32>, vector<8x8xf32>, vector<8x8xf32> -> vector<8x8xf32>
      %80 = tpu.reciprocal %78 {approx = true} : vector<1x1xf32> -> vector<1x1xf32>
      %81 = vector.broadcast %80 : vector<1x1xf32> to vector<8x8xf32>
      %82 = arith.mulf %79, %81 : vector<8x8xf32>
      %83 = arith.mulf %82, %82 : vector<8x8xf32>
      %cst_26 = arith.constant dense<0.000000e+00> : vector<8xf32>
      %84 = vector.multi_reduction <add>, %83, %cst_26 [1] : vector<8x8xf32> to vector<8xf32>
      %85 = vector.shape_cast %84 : vector<8xf32> to vector<8x1xf32>
      %cst_27 = arith.constant dense<0.000000e+00> : vector<1xf32>
      %86 = vector.multi_reduction <add>, %85, %cst_27 [0] : vector<8x1xf32> to vector<1xf32>
      %87 = vector.shape_cast %86 : vector<1xf32> to vector<1x1xf32>
      %cst_28 = arith.constant dense<0.000000e+00> : vector<8x8xf32>
      %88 = tpu.matmul %82, %82, %cst_28 {dimension_numbers = #tpu.dot_dimension_numbers<[1], [0], [0], [1], [0, 0, 1, 1], [], []>} : vector<8x8xf32>, vector<8x8xf32>, vector<8x8xf32> -> vector<8x8xf32>
      %89 = tpu.reciprocal %87 {approx = true} : vector<1x1xf32> -> vector<1x1xf32>
      %90 = vector.broadcast %89 : vector<1x1xf32> to vector<8x8xf32>
      %91 = arith.mulf %88, %90 : vector<8x8xf32>
      %92 = arith.mulf %91, %91 : vector<8x8xf32>
      %cst_29 = arith.constant dense<0.000000e+00> : vector<8xf32>
      %93 = vector.multi_reduction <add>, %92, %cst_29 [1] : vector<8x8xf32> to vector<8xf32>
      %94 = vector.shape_cast %93 : vector<8xf32> to vector<8x1xf32>
      %cst_30 = arith.constant dense<0.000000e+00> : vector<1xf32>
      %95 = vector.multi_reduction <add>, %94, %cst_30 [0] : vector<8x1xf32> to vector<1xf32>
      %96 = vector.shape_cast %95 : vector<1xf32> to vector<1x1xf32>
      %cst_31 = arith.constant dense<0.000000e+00> : vector<8x8xf32>
      %97 = tpu.matmul %91, %91, %cst_31 {dimension_numbers = #tpu.dot_dimension_numbers<[1], [0], [0], [1], [0, 0, 1, 1], [], []>} : vector<8x8xf32>, vector<8x8xf32>, vector<8x8xf32> -> vector<8x8xf32>
      %98 = tpu.reciprocal %96 {approx = true} : vector<1x1xf32> -> vector<1x1xf32>
      %99 = vector.broadcast %98 : vector<1x1xf32> to vector<8x8xf32>
      %100 = arith.mulf %97, %99 : vector<8x8xf32>
      %101 = arith.mulf %100, %100 : vector<8x8xf32>
      %cst_32 = arith.constant dense<0.000000e+00> : vector<8xf32>
      %102 = vector.multi_reduction <add>, %101, %cst_32 [1] : vector<8x8xf32> to vector<8xf32>
      %103 = vector.shape_cast %102 : vector<8xf32> to vector<8x1xf32>
      %cst_33 = arith.constant dense<0.000000e+00> : vector<1xf32>
      %104 = vector.multi_reduction <add>, %103, %cst_33 [0] : vector<8x1xf32> to vector<1xf32>
      %105 = vector.shape_cast %104 : vector<1xf32> to vector<1x1xf32>
      %cst_34 = arith.constant dense<0.000000e+00> : vector<8x8xf32>
      %106 = tpu.matmul %100, %100, %cst_34 {dimension_numbers = #tpu.dot_dimension_numbers<[1], [0], [0], [1], [0, 0, 1, 1], [], []>} : vector<8x8xf32>, vector<8x8xf32>, vector<8x8xf32> -> vector<8x8xf32>
      %107 = tpu.reciprocal %105 {approx = true} : vector<1x1xf32> -> vector<1x1xf32>
      %108 = vector.broadcast %107 : vector<1x1xf32> to vector<8x8xf32>
      %109 = arith.mulf %106, %108 : vector<8x8xf32>
      %110 = arith.mulf %109, %109 : vector<8x8xf32>
      %cst_35 = arith.constant dense<0.000000e+00> : vector<8xf32>
      %111 = vector.multi_reduction <add>, %110, %cst_35 [1] : vector<8x8xf32> to vector<8xf32>
      %112 = vector.shape_cast %111 : vector<8xf32> to vector<8x1xf32>
      %cst_36 = arith.constant dense<0.000000e+00> : vector<1xf32>
      %113 = vector.multi_reduction <add>, %112, %cst_36 [0] : vector<8x1xf32> to vector<1xf32>
      %114 = vector.shape_cast %113 : vector<1xf32> to vector<1x1xf32>
      %cst_37 = arith.constant dense<0.000000e+00> : vector<8x8xf32>
      %115 = tpu.matmul %109, %109, %cst_37 {dimension_numbers = #tpu.dot_dimension_numbers<[1], [0], [0], [1], [0, 0, 1, 1], [], []>} : vector<8x8xf32>, vector<8x8xf32>, vector<8x8xf32> -> vector<8x8xf32>
      %116 = tpu.reciprocal %114 {approx = true} : vector<1x1xf32> -> vector<1x1xf32>
      %117 = vector.broadcast %116 : vector<1x1xf32> to vector<8x8xf32>
      %118 = arith.mulf %115, %117 : vector<8x8xf32>
      %119 = arith.mulf %118, %118 : vector<8x8xf32>
      %cst_38 = arith.constant dense<0.000000e+00> : vector<8xf32>
      %120 = vector.multi_reduction <add>, %119, %cst_38 [1] : vector<8x8xf32> to vector<8xf32>
      %121 = vector.shape_cast %120 : vector<8xf32> to vector<8x1xf32>
      %cst_39 = arith.constant dense<0.000000e+00> : vector<1xf32>
      %122 = vector.multi_reduction <add>, %121, %cst_39 [0] : vector<8x1xf32> to vector<1xf32>
      %123 = vector.shape_cast %122 : vector<1xf32> to vector<1x1xf32>
      %cst_40 = arith.constant dense<0.000000e+00> : vector<8x8xf32>
      %124 = tpu.matmul %118, %118, %cst_40 {dimension_numbers = #tpu.dot_dimension_numbers<[1], [0], [0], [1], [0, 0, 1, 1], [], []>} : vector<8x8xf32>, vector<8x8xf32>, vector<8x8xf32> -> vector<8x8xf32>
      %125 = tpu.reciprocal %123 {approx = true} : vector<1x1xf32> -> vector<1x1xf32>
      %126 = vector.broadcast %125 : vector<1x1xf32> to vector<8x8xf32>
      %127 = arith.mulf %124, %126 : vector<8x8xf32>
      %128 = arith.mulf %127, %127 : vector<8x8xf32>
      %cst_41 = arith.constant dense<0.000000e+00> : vector<8xf32>
      %129 = vector.multi_reduction <add>, %128, %cst_41 [1] : vector<8x8xf32> to vector<8xf32>
      %130 = vector.shape_cast %129 : vector<8xf32> to vector<8x1xf32>
      %cst_42 = arith.constant dense<0.000000e+00> : vector<1xf32>
      %131 = vector.multi_reduction <add>, %130, %cst_42 [0] : vector<8x1xf32> to vector<1xf32>
      %132 = vector.shape_cast %131 : vector<1xf32> to vector<1x1xf32>
      %cst_43 = arith.constant dense<0.000000e+00> : vector<8x8xf32>
      %133 = tpu.matmul %127, %127, %cst_43 {dimension_numbers = #tpu.dot_dimension_numbers<[1], [0], [0], [1], [0, 0, 1, 1], [], []>} : vector<8x8xf32>, vector<8x8xf32>, vector<8x8xf32> -> vector<8x8xf32>
      %134 = tpu.reciprocal %132 {approx = true} : vector<1x1xf32> -> vector<1x1xf32>
      %135 = vector.broadcast %134 : vector<1x1xf32> to vector<8x8xf32>
      %136 = arith.mulf %133, %135 : vector<8x8xf32>
      %137 = arith.mulf %136, %136 : vector<8x8xf32>
      %cst_44 = arith.constant dense<0.000000e+00> : vector<8xf32>
      %138 = vector.multi_reduction <add>, %137, %cst_44 [1] : vector<8x8xf32> to vector<8xf32>
      %139 = vector.shape_cast %138 : vector<8xf32> to vector<8x1xf32>
      %cst_45 = arith.constant dense<0.000000e+00> : vector<1xf32>
      %140 = vector.multi_reduction <add>, %139, %cst_45 [0] : vector<8x1xf32> to vector<1xf32>
      %141 = vector.shape_cast %140 : vector<1xf32> to vector<1x1xf32>
      %cst_46 = arith.constant dense<0.000000e+00> : vector<8x8xf32>
      %142 = tpu.matmul %136, %136, %cst_46 {dimension_numbers = #tpu.dot_dimension_numbers<[1], [0], [0], [1], [0, 0, 1, 1], [], []>} : vector<8x8xf32>, vector<8x8xf32>, vector<8x8xf32> -> vector<8x8xf32>
      %143 = tpu.reciprocal %141 {approx = true} : vector<1x1xf32> -> vector<1x1xf32>
      %144 = vector.broadcast %143 : vector<1x1xf32> to vector<8x8xf32>
      %145 = arith.mulf %142, %144 : vector<8x8xf32>
      %146 = arith.mulf %145, %145 : vector<8x8xf32>
      %cst_47 = arith.constant dense<0.000000e+00> : vector<8xf32>
      %147 = vector.multi_reduction <add>, %146, %cst_47 [1] : vector<8x8xf32> to vector<8xf32>
      %148 = vector.shape_cast %147 : vector<8xf32> to vector<8x1xf32>
      %cst_48 = arith.constant dense<0.000000e+00> : vector<1xf32>
      %149 = vector.multi_reduction <add>, %148, %cst_48 [0] : vector<8x1xf32> to vector<1xf32>
      %150 = vector.shape_cast %149 : vector<1xf32> to vector<1x1xf32>
      %cst_49 = arith.constant dense<0.000000e+00> : vector<8x8xf32>
      %151 = tpu.matmul %145, %145, %cst_49 {dimension_numbers = #tpu.dot_dimension_numbers<[1], [0], [0], [1], [0, 0, 1, 1], [], []>} : vector<8x8xf32>, vector<8x8xf32>, vector<8x8xf32> -> vector<8x8xf32>
      %152 = tpu.reciprocal %150 {approx = true} : vector<1x1xf32> -> vector<1x1xf32>
      %153 = vector.broadcast %152 : vector<1x1xf32> to vector<8x8xf32>
      %154 = arith.mulf %151, %153 : vector<8x8xf32>
      %155 = arith.mulf %154, %154 : vector<8x8xf32>
      %cst_50 = arith.constant dense<0.000000e+00> : vector<8xf32>
      %156 = vector.multi_reduction <add>, %155, %cst_50 [1] : vector<8x8xf32> to vector<8xf32>
      %157 = vector.shape_cast %156 : vector<8xf32> to vector<8x1xf32>
      %cst_51 = arith.constant dense<0.000000e+00> : vector<1xf32>
      %158 = vector.multi_reduction <add>, %157, %cst_51 [0] : vector<8x1xf32> to vector<1xf32>
      %159 = vector.shape_cast %158 : vector<1xf32> to vector<1x1xf32>
      %cst_52 = arith.constant dense<0.000000e+00> : vector<8x8xf32>
      %160 = tpu.matmul %154, %154, %cst_52 {dimension_numbers = #tpu.dot_dimension_numbers<[1], [0], [0], [1], [0, 0, 1, 1], [], []>} : vector<8x8xf32>, vector<8x8xf32>, vector<8x8xf32> -> vector<8x8xf32>
      %161 = tpu.reciprocal %159 {approx = true} : vector<1x1xf32> -> vector<1x1xf32>
      %162 = vector.broadcast %161 : vector<1x1xf32> to vector<8x8xf32>
      %163 = arith.mulf %160, %162 : vector<8x8xf32>
      %164 = arith.mulf %163, %7 : vector<8x8xf32>
      %cst_53 = arith.constant dense<0.000000e+00> : vector<8xf32>
      %165 = vector.multi_reduction <add>, %164, %cst_53 [1] : vector<8x8xf32> to vector<8xf32>
      %166 = vector.shape_cast %165 : vector<8xf32> to vector<8x1xf32>
      %cst_54 = arith.constant dense<0.000000e+00> : vector<1xf32>
      %167 = vector.multi_reduction <add>, %166, %cst_54 [0] : vector<8x1xf32> to vector<1xf32>
      %168 = vector.shape_cast %167 : vector<1xf32> to vector<1x1xf32>
      %169 = vector.broadcast %168 : vector<1x1xf32> to vector<8x8xf32>
      %170 = arith.divf %163, %169 : vector<8x8xf32>
      %cst_55 = arith.constant dense<0.000000e+00> : vector<8x8xf32>
      %171 = tpu.matmul %170, %2, %cst_55 {dimension_numbers = #tpu.dot_dimension_numbers<[1], [0], [0], [1], [0, 0, 1, 1], [], []>} : vector<8x8xf32>, vector<8x8xf32>, vector<8x8xf32> -> vector<8x8xf32>
      %cst_56 = arith.constant dense<0.000000e+00> : vector<8x8xf32>
      %172 = tpu.matmul %2, %171, %cst_56 {dimension_numbers = #tpu.dot_dimension_numbers<[1], [0], [0], [1], [0, 0, 1, 1], [], []>} : vector<8x8xf32>, vector<8x8xf32>, vector<8x8xf32> -> vector<8x8xf32>
      %173 = arith.addf %44, %1 : vector<8x8xf32>
      %174 = arith.mulf %173, %172 : vector<8x8xf32>
      %cst_57 = arith.constant dense<0.000000e+00> : vector<8xf32>
      %175 = vector.multi_reduction <add>, %174, %cst_57 [1] : vector<8x8xf32> to vector<8xf32>
      %176 = vector.shape_cast %175 : vector<8xf32> to vector<8x1xf32>
      %cst_58 = arith.constant dense<0.000000e+00> : vector<1xf32>
      %177 = vector.multi_reduction <add>, %176, %cst_58 [0] : vector<8x1xf32> to vector<1xf32>
      %178 = vector.shape_cast %177 : vector<1xf32> to vector<1x1xf32>
      %cst_59 = arith.constant dense<0.000000e+00> : vector<8x64xf32>
      %179 = tpu.matmul %172, %20, %cst_59 {dimension_numbers = #tpu.dot_dimension_numbers<[1], [0], [0], [1], [0, 0, 1, 1], [], []>} : vector<8x8xf32>, vector<8x64xf32>, vector<8x64xf32> -> vector<8x64xf32>
      %180 = arith.mulf %15, %179 : vector<8x64xf32>
      %cst_60 = arith.constant dense<0.000000e+00> : vector<8x64xf32>
      %181 = tpu.matmul %8, %180, %cst_60 {dimension_numbers = #tpu.dot_dimension_numbers<[1], [0], [0], [1], [0, 0, 1, 1], [], []>} : vector<8x8xf32>, vector<8x64xf32>, vector<8x64xf32> -> vector<8x64xf32>
      scf.yield %181, %178 : vector<8x64xf32>, vector<1x1xf32>
    }
    %cst_7 = arith.constant 0.000000e+00 : f32
    %32 = vector.broadcast %cst_7 : f32 to vector<8x128xf32>
    %33 = vector.broadcast %31#1 : vector<1x1xf32> to vector<8x128xf32>
    %34 = arith.addf %32, %33 : vector<8x128xf32>
    %c0_8 = arith.constant 0 : index
    %c0_9 = arith.constant 0 : index
    %35 = vector.load %arg2[%c0_8, %c0_9] : memref<8x128xf32, #tpu.memory_space<vmem>>, vector<8x128xf32>
    tpu.vector_store %arg2[%c0_8, %c0_9], %34 {strides = array<i32>} : memref<8x128xf32, #tpu.memory_space<vmem>>, vector<8x128xf32>,
    return
  }
}

</mosaic_0001>

<llo_original>
// kernel: _scf_pallas.1
$region0: #{_scf_pallas.1}
  #allocation0 [shape = 'u32[]', space=smem, size = 0x4, offset = 0x4, fixed_abs, tag = 'smem constant byte address 0x4 - core index']
  #allocation1 [shape = 'u32[72,128]{1,0:T(1,128)}', space=vmem, size = 0x9000, scoped, tag = 'internal scratch']
  %s0 = inlined_call_operand.hbm [shape: f32[64,128], index: 0, kind: input, shape index: {}]
  %s1 = inlined_call_operand.vmem [shape: f32[16,8], index: 1, kind: input, shape index: {}]
  %s2 = inlined_call_operand.vmem [shape: f32[8,128], index: 2, kind: output, shape index: {}]
  %s3 = sld [smem:[#allocation0]]
  $region29: #{_scf_pallas.1} parent=0
    _
  %s5 = ssub.s32 1, %s3
  %s6 = scalar_select 0, %s5, %s3
  $region1: #{_scf_pallas.1} parent=0
    #allocation2 [shape = 'u8[32768]{0}', space=vmem, size = 0x8000, scoped, tag = 'input window, operand 0, single buffered']
    #allocation3 [shape = 's32[1]{0}', space=sflag, size = 0x4, scoped, tag = 'scoped memory for _scf_pallas.1']
    %7 = vsyncpa [#allocation3], 0
    // Predicated region
    $region2: #{_scf_pallas.1} parent=1 // pred_check
      _
    $region3: #{_scf_pallas.1} parent=1 // pred_check_branch
      %9 = sbr.rel (0) target = $region5
    $region4: #{_scf_pallas.1} parent=1 // pred_region
      %11 = vsyncadd [#allocation3], 0
      %s12 = sshll.u32 %s0, 4
      %s13 = int_to_ptr.hbm [resolvable:$true] %s12
      %s14 = sshll.u32 [#allocation2], 4
      %s15 = int_to_ptr.vmem [resolvable:$true] %s14
      %20 = dma.hbm_to_vmem [thread:$0]  %s13, 1024, %s15, [#allocation3], 128, 128, 8
    $region5: #{_scf_pallas.1} parent=1 // pred_fallthru
      _
    // Predicated region
    $region6: #{_scf_pallas.1} parent=1 // pred_check
      _
    $region7: #{_scf_pallas.1} parent=1 // pred_check_branch
      %22 = sbr.rel (0) target = $region9
    $region8: #{_scf_pallas.1} parent=1 // pred_region
      _
    $region9: #{_scf_pallas.1} parent=1 // pred_fallthru
      _
    // Predicated region
    $region10: #{_scf_pallas.1} parent=1 // pred_check
      _
    $region11: #{_scf_pallas.1} parent=1 // pred_check_branch
      %24 = sbr.rel (0) target = $region13
    $region12: #{_scf_pallas.1} parent=1 // pred_region
      %26 = dma.done [#allocation3], 1024
    $region13: #{_scf_pallas.1} parent=1 // pred_fallthru
      _
    %v27 = vld [vmem:[#allocation2] sm:$0xff]
    %v28 = vld [vmem:[#allocation2 + $0x8] sm:$0xff]
    %v29 = vld [vmem:[#allocation2 + $0x10] sm:$0xff]
    %v30 = vld [vmem:[#allocation2 + $0x18] sm:$0xff]
    %v31 = vld [vmem:[#allocation2 + $0x20] sm:$0xff]
    %v32 = vld [vmem:[#allocation2 + $0x28] sm:$0xff]
    %v33 = vld [vmem:[#allocation2 + $0x30] sm:$0xff]
    %v34 = vld [vmem:[#allocation2 + $0x38] sm:$0xff]
    %v35 = vld [vmem:[%s1] sm:$0xff]
    %v36 = vld [vmem:[%s1 + $0x8] sm:$0xff]
    %v37 = vlaneseq
    %v38 = vshrl.u32 %v37, 7
    %v39 = vlaneseq
    %v40 = vand.u32 %v39, 127
    %vm41 = vcmp.eq.s32.totalorder %v38, %v40
    %v42 = vsel %vm41, 1, 0
    %v43 = vcvt.s32.f32 %v42
    %v44 = vshra.s32 %v40, 3
    %vm45 = vcmp.eq.s32.totalorder %v44, %v38
    %v46 = vsel %vm45, 1, 0
    %v47 = vcvt.s32.f32 %v46
    %v48 = vand.u32 %v40, 7
    %vm49 = vcmp.eq.s32.totalorder %v48, %v38
    %v50 = vsel %vm49, 1, 0
    %v51 = vcvt.s32.f32 %v50
    %v52 = vadd.s32 %v38, 8
    %v53 = vadd.s32 %v38, 16
    %v54 = vadd.s32 %v38, 24
    %v55 = vadd.s32 %v38, 32
    %v56 = vadd.s32 %v38, 40
    %v57 = vadd.s32 %v38, 48
    %v58 = vadd.s32 %v38, 56
    %v59 = vand.u32 %v38, 7
    %v60 = vand.u32 %v52, 7
    %v61 = vand.u32 %v53, 7
    %v62 = vand.u32 %v54, 7
    %v63 = vand.u32 %v55, 7
    %v64 = vand.u32 %v56, 7
    %v65 = vand.u32 %v57, 7
    %v66 = vand.u32 %v58, 7
    %vm67 = vcmp.eq.s32.totalorder %v59, %v40
    %vm68 = vcmp.eq.s32.totalorder %v60, %v40
    %vm69 = vcmp.eq.s32.totalorder %v61, %v40
    %vm70 = vcmp.eq.s32.totalorder %v62, %v40
    %vm71 = vcmp.eq.s32.totalorder %v63, %v40
    %vm72 = vcmp.eq.s32.totalorder %v64, %v40
    %vm73 = vcmp.eq.s32.totalorder %v65, %v40
    %vm74 = vcmp.eq.s32.totalorder %v66, %v40
    %v75 = vsel %vm67, 1, 0
    %v76 = vsel %vm68, 1, 0
    %v77 = vsel %vm69, 1, 0
    %v78 = vsel %vm70, 1, 0
    %v79 = vsel %vm71, 1, 0
    %v80 = vsel %vm72, 1, 0
    %v81 = vsel %vm73, 1, 0
    %v82 = vsel %vm74, 1, 0
    %v83 = vcvt.s32.f32 %v75
    %v84 = vcvt.s32.f32 %v76
    %v85 = vcvt.s32.f32 %v77
    %v86 = vcvt.s32.f32 %v78
    %v87 = vcvt.s32.f32 %v79
    %v88 = vcvt.s32.f32 %v80
    %v89 = vcvt.s32.f32 %v81
    %v90 = vcvt.s32.f32 %v82
    loop: start=0, step=1, limit=20
    $region14: #{_scf_pallas.1} parent=1 // loop_pre_header
      _
    $region15: #{_scf_pallas.1} parent=1 // loop_header
      %s92 = sphi 0, %s96
      %p93 = scmp.ge.s32.totalorder %s92, 20
      %v97 = vphi 0.0, %v769
      %v98 = vphi 0.0, %v723
    $region16: #{_scf_pallas.1} parent=1 // loop_header_branch
      %95 = sbr.rel (%p93) target = $region20
    $region17: #{_scf_pallas.1} parent=1 // loop_body
      %vm99 = vcmask 523264
      %v101 = vsel %vm99, %v97, 0
      %103 = vmatpush.msra.mxu0 0.0
      %104 = vmatpush.msra.mxu0 0.0
      %105 = vmatpush.msra.mxu0 0.0
      %106 = vmatpush.msra.mxu0 0.0
      %107 = vmatpush.msra.mxu0 0.0
      %108 = vmatpush.msra.mxu0 0.0
      %109 = vmatpush.msra.mxu0 0.0
      %110 = vmatpush.msra.mxu0 0.0
      %111 = vmatpush.msra.mxu0 %v34
      %112 = vmatpush.msra.mxu0 %v33
      %113 = vmatpush.msra.mxu0 %v32
      %114 = vmatpush.msra.mxu0 %v31
      %115 = vmatpush.msra.mxu0 %v30
      %116 = vmatpush.msra.mxu0 %v29
      %117 = vmatpush.msra.mxu0 %v28
      %118 = vmatpush.msra.mxu0 %v27
      %119 = vmatmul.f32.gmra.mxu0 %v101
      %v120 = vpop.f32.mrf.mxu0
      %v121 = vadd.f32 0.0, %v120
      %122 = vdwg.mxu0
      %v123 = vmul.f32 %v121, 2.0
      %125 = vrot.lane.b32.xlu0 %v121, 64
      %v126 = vpop.permute.xlu0 %125
      %v128 = vsub.f32 %v123, %v126
      %v129 = vmul.f32 %v47, %v128
      %v131 = vsel %vm99, %v129, 0
      %133 = vmatpush.msra.mxu0 0.0
      %134 = vmatpush.msra.mxu0 0.0
      %135 = vmatpush.msra.mxu0 0.0
      %136 = vmatpush.msra.mxu0 0.0
      %137 = vmatpush.msra.mxu0 0.0
      %138 = vmatpush.msra.mxu0 0.0
      %139 = vmatpush.msra.mxu0 0.0
      %140 = vmatpush.msra.mxu0 0.0
      %141 = vmatpush.msra.mxu0 %v90
      %142 = vmatpush.msra.mxu0 %v89
      %143 = vmatpush.msra.mxu0 %v88
      %144 = vmatpush.msra.mxu0 %v87
      %145 = vmatpush.msra.mxu0 %v86
      %146 = vmatpush.msra.mxu0 %v85
      %147 = vmatpush.msra.mxu0 %v84
      %148 = vmatpush.msra.mxu0 %v83
      %149 = vmatmul.f32.gmra.mxu0 %v131
      %v150 = vpop.f32.mrf.mxu0
      %v151 = vadd.f32 0.0, %v150
      %152 = vdwg.mxu0
      %v153 = vadd.f32 %v35, %v151
      %vm154 = vcmask 64512
      %v156 = vsel %vm154, %v153, 0
      %158 = vmatpush.msra.mxu0 0.0
      %159 = vmatpush.msra.mxu0 0.0
      %160 = vmatpush.msra.mxu0 0.0
      %161 = vmatpush.msra.mxu0 0.0
      %162 = vmatpush.msra.mxu0 0.0
      %163 = vmatpush.msra.mxu0 0.0
      %164 = vmatpush.msra.mxu0 0.0
      %165 = vmatpush.msra.mxu0 0.0
      %166 = vmatpush.msra.mxu0 0.0
      %167 = vmatpush.msra.mxu0 0.0
      %168 = vmatpush.msra.mxu0 0.0
      %169 = vmatpush.msra.mxu0 0.0
      %170 = vmatpush.msra.mxu0 0.0
      %171 = vmatpush.msra.mxu0 0.0
      %172 = vmatpush.msra.mxu0 0.0
      %173 = vmatpush.msra.mxu0 %v36
      %174 = vmatmul.f32.gmra.mxu0 %v156
      %v175 = vpop.f32.mrf.mxu0
      %v176 = vadd.f32 0.0, %v175
      %177 = vdwg.mxu0
      %v179 = vsel %vm154, %v36, 0
      %181 = vmatpush.msra.mxu0 0.0
      %182 = vmatpush.msra.mxu0 0.0
      %183 = vmatpush.msra.mxu0 0.0
      %184 = vmatpush.msra.mxu0 0.0
      %185 = vmatpush.msra.mxu0 0.0
      %186 = vmatpush.msra.mxu0 0.0
      %187 = vmatpush.msra.mxu0 0.0
      %188 = vmatpush.msra.mxu0 0.0
      %189 = vmatpush.msra.mxu0 0.0
      %190 = vmatpush.msra.mxu0 0.0
      %191 = vmatpush.msra.mxu0 0.0
      %192 = vmatpush.msra.mxu0 0.0
      %193 = vmatpush.msra.mxu0 0.0
      %194 = vmatpush.msra.mxu0 0.0
      %195 = vmatpush.msra.mxu0 0.0
      %196 = vmatpush.msra.mxu0 %v176
      %197 = vmatmul.f32.gmra.mxu0 %v179
      %v198 = vpop.f32.mrf.mxu0
      %v199 = vadd.f32 0.0, %v198
      %200 = vdwg.mxu0
      %v201 = vmul.f32 %v199, %v199
      %v202 = vsel %vm154, %v201, 0.0
      %203 = vadd.xlane.f32.xlu0 %v202
      %v204 = vpop.xlane.xlu0 %203
      %v205 = vrot.slane %v204, 4
      %v206 = vadd.f32 %v204, %v205
      %v207 = vrot.slane %v206, 2
      %v208 = vadd.f32 %v206, %v207
      %v209 = vrot.slane %v208, 1
      %v210 = vadd.f32 %v208, %v209
      %v211 = vrsqrt.pop %v210
      %v212 = vmul.f32 %v211, %v210
      %v213 = vmul.f32 %v212, %v211
      %v214 = vmul.f32 0.5, %v213
      %v215 = vsub.f32 1.5, %v214
      %v216 = vmul.f32 %v211, %v215
      %v217 = vmul.f32 %v210, %v216
      %vm218 = vcmp.eq.f32.partialorder %v210, inf
      %v219 = vsel %vm218, %v210, %v217
      %vm220 = vcmp.eq.f32.partialorder %v210, 0.0
      %v221 = vand.u32 %v210, 2147483648
      %v222 = vsel %vm220, %v221, %v219
      %v223 = vmul.f32 %v222, %v43
      %v224 = vsub.f32 %v223, %v199
      %v225 = vmul.f32 %v224, %v224
      %v226 = vsel %vm154, %v225, 0.0
      %227 = vadd.xlane.f32.xlu0 %v226
      %v228 = vpop.xlane.xlu0 %227
      %v229 = vrot.slane %v228, 4
      %v230 = vadd.f32 %v228, %v229
      %v231 = vrot.slane %v230, 2
      %v232 = vadd.f32 %v230, %v231
      %v233 = vrot.slane %v232, 1
      %v234 = vadd.f32 %v232, %v233
      %v236 = vsel %vm154, %v224, 0
      %238 = vmatpush.msra.mxu0 0.0
      %239 = vmatpush.msra.mxu0 0.0
      %240 = vmatpush.msra.mxu0 0.0
      %241 = vmatpush.msra.mxu0 0.0
      %242 = vmatpush.msra.mxu0 0.0
      %243 = vmatpush.msra.mxu0 0.0
      %244 = vmatpush.msra.mxu0 0.0
      %245 = vmatpush.msra.mxu0 0.0
      %246 = vmatpush.msra.mxu0 0.0
      %247 = vmatpush.msra.mxu0 0.0
      %248 = vmatpush.msra.mxu0 0.0
      %249 = vmatpush.msra.mxu0 0.0
      %250 = vmatpush.msra.mxu0 0.0
      %251 = vmatpush.msra.mxu0 0.0
      %252 = vmatpush.msra.mxu0 0.0
      %253 = vmatpush.msra.mxu0 %v224
      %254 = vmatmul.f32.gmra.mxu0 %v236
      %v255 = vpop.f32.mrf.mxu0
      %v256 = vadd.f32 0.0, %v255
      %257 = vdwg.mxu0
      %v258 = vrcp.pop %v234
      %v259 = vmul.f32 %v256, %v258
      %v260 = vmul.f32 %v259, %v259
      %v261 = vsel %vm154, %v260, 0.0
      %262 = vadd.xlane.f32.xlu0 %v261
      %v263 = vpop.xlane.xlu0 %262
      %v264 = vrot.slane %v263, 4
      %v265 = vadd.f32 %v263, %v264
      %v266 = vrot.slane %v265, 2
      %v267 = vadd.f32 %v265, %v266
      %v268 = vrot.slane %v267, 1
      %v269 = vadd.f32 %v267, %v268
      %v271 = vsel %vm154, %v259, 0
      %273 = vmatpush.msra.mxu0 0.0
      %274 = vmatpush.msra.mxu0 0.0
      %275 = vmatpush.msra.mxu0 0.0
      %276 = vmatpush.msra.mxu0 0.0
      %277 = vmatpush.msra.mxu0 0.0
      %278 = vmatpush.msra.mxu0 0.0
      %279 = vmatpush.msra.mxu0 0.0
      %280 = vmatpush.msra.mxu0 0.0
      %281 = vmatpush.msra.mxu0 0.0
      %282 = vmatpush.msra.mxu0 0.0
      %283 = vmatpush.msra.mxu0 0.0
      %284 = vmatpush.msra.mxu0 0.0
      %285 = vmatpush.msra.mxu0 0.0
      %286 = vmatpush.msra.mxu0 0.0
      %287 = vmatpush.msra.mxu0 0.0
      %288 = vmatpush.msra.mxu0 %v259
      %289 = vmatmul.f32.gmra.mxu0 %v271
      %v290 = vpop.f32.mrf.mxu0
      %v291 = vadd.f32 0.0, %v290
      %292 = vdwg.mxu0
      %v293 = vrcp.pop %v269
      %v294 = vmul.f32 %v291, %v293
      %v295 = vmul.f32 %v294, %v294
      %v296 = vsel %vm154, %v295, 0.0
      %297 = vadd.xlane.f32.xlu0 %v296
      %v298 = vpop.xlane.xlu0 %297
      %v299 = vrot.slane %v298, 4
      %v300 = vadd.f32 %v298, %v299
      %v301 = vrot.slane %v300, 2
      %v302 = vadd.f32 %v300, %v301
      %v303 = vrot.slane %v302, 1
      %v304 = vadd.f32 %v302, %v303
      %v306 = vsel %vm154, %v294, 0
      %308 = vmatpush.msra.mxu0 0.0
      %309 = vmatpush.msra.mxu0 0.0
      %310 = vmatpush.msra.mxu0 0.0
      %311 = vmatpush.msra.mxu0 0.0
      %312 = vmatpush.msra.mxu0 0.0
      %313 = vmatpush.msra.mxu0 0.0
      %314 = vmatpush.msra.mxu0 0.0
      %315 = vmatpush.msra.mxu0 0.0
      %316 = vmatpush.msra.mxu0 0.0
      %317 = vmatpush.msra.mxu0 0.0
      %318 = vmatpush.msra.mxu0 0.0
      %319 = vmatpush.msra.mxu0 0.0
      %320 = vmatpush.msra.mxu0 0.0
      %321 = vmatpush.msra.mxu0 0.0
      %322 = vmatpush.msra.mxu0 0.0
      %323 = vmatpush.msra.mxu0 %v294
      %324 = vmatmul.f32.gmra.mxu0 %v306
      %v325 = vpop.f32.mrf.mxu0
      %v326 = vadd.f32 0.0, %v325
      %327 = vdwg.mxu0
      %v328 = vrcp.pop %v304
      %v329 = vmul.f32 %v326, %v328
      %v330 = vmul.f32 %v329, %v329
      %v331 = vsel %vm154, %v330, 0.0
      %332 = vadd.xlane.f32.xlu0 %v331
      %v333 = vpop.xlane.xlu0 %332
      %v334 = vrot.slane %v333, 4
      %v335 = vadd.f32 %v333, %v334
      %v336 = vrot.slane %v335, 2
      %v337 = vadd.f32 %v335, %v336
      %v338 = vrot.slane %v337, 1
      %v339 = vadd.f32 %v337, %v338
      %v341 = vsel %vm154, %v329, 0
      %343 = vmatpush.msra.mxu0 0.0
      %344 = vmatpush.msra.mxu0 0.0
      %345 = vmatpush.msra.mxu0 0.0
      %346 = vmatpush.msra.mxu0 0.0
      %347 = vmatpush.msra.mxu0 0.0
      %348 = vmatpush.msra.mxu0 0.0
      %349 = vmatpush.msra.mxu0 0.0
      %350 = vmatpush.msra.mxu0 0.0
      %351 = vmatpush.msra.mxu0 0.0
      %352 = vmatpush.msra.mxu0 0.0
      %353 = vmatpush.msra.mxu0 0.0
      %354 = vmatpush.msra.mxu0 0.0
      %355 = vmatpush.msra.mxu0 0.0
      %356 = vmatpush.msra.mxu0 0.0
      %357 = vmatpush.msra.mxu0 0.0
      %358 = vmatpush.msra.mxu0 %v329
      %359 = vmatmul.f32.gmra.mxu0 %v341
      %v360 = vpop.f32.mrf.mxu0
      %v361 = vadd.f32 0.0, %v360
      %362 = vdwg.mxu0
      %v363 = vrcp.pop %v339
      %v364 = vmul.f32 %v361, %v363
      %v365 = vmul.f32 %v364, %v364
      %v366 = vsel %vm154, %v365, 0.0
      %367 = vadd.xlane.f32.xlu0 %v366
      %v368 = vpop.xlane.xlu0 %367
      %v369 = vrot.slane %v368, 4
      %v370 = vadd.f32 %v368, %v369
      %v371 = vrot.slane %v370, 2
      %v372 = vadd.f32 %v370, %v371
      %v373 = vrot.slane %v372, 1
      %v374 = vadd.f32 %v372, %v373
      %v376 = vsel %vm154, %v364, 0
      %378 = vmatpush.msra.mxu0 0.0
      %379 = vmatpush.msra.mxu0 0.0
      %380 = vmatpush.msra.mxu0 0.0
      %381 = vmatpush.msra.mxu0 0.0
      %382 = vmatpush.msra.mxu0 0.0
      %383 = vmatpush.msra.mxu0 0.0
      %384 = vmatpush.msra.mxu0 0.0
      %385 = vmatpush.msra.mxu0 0.0
      %386 = vmatpush.msra.mxu0 0.0
      %387 = vmatpush.msra.mxu0 0.0
      %388 = vmatpush.msra.mxu0 0.0
      %389 = vmatpush.msra.mxu0 0.0
      %390 = vmatpush.msra.mxu0 0.0
      %391 = vmatpush.msra.mxu0 0.0
      %392 = vmatpush.msra.mxu0 0.0
      %393 = vmatpush.msra.mxu0 %v364
      %394 = vmatmul.f32.gmra.mxu0 %v376
      %v395 = vpop.f32.mrf.mxu0
      %v396 = vadd.f32 0.0, %v395
      %397 = vdwg.mxu0
      %v398 = vrcp.pop %v374
      %v399 = vmul.f32 %v396, %v398
      %v400 = vmul.f32 %v399, %v399
      %v401 = vsel %vm154, %v400, 0.0
      %402 = vadd.xlane.f32.xlu0 %v401
      %v403 = vpop.xlane.xlu0 %402
      %v404 = vrot.slane %v403, 4
      %v405 = vadd.f32 %v403, %v404
      %v406 = vrot.slane %v405, 2
      %v407 = vadd.f32 %v405, %v406
      %v408 = vrot.slane %v407, 1
      %v409 = vadd.f32 %v407, %v408
      %v411 = vsel %vm154, %v399, 0
      %413 = vmatpush.msra.mxu0 0.0
      %414 = vmatpush.msra.mxu0 0.0
      %415 = vmatpush.msra.mxu0 0.0
      %416 = vmatpush.msra.mxu0 0.0
      %417 = vmatpush.msra.mxu0 0.0
      %418 = vmatpush.msra.mxu0 0.0
      %419 = vmatpush.msra.mxu0 0.0
      %420 = vmatpush.msra.mxu0 0.0
      %421 = vmatpush.msra.mxu0 0.0
      %422 = vmatpush.msra.mxu0 0.0
      %423 = vmatpush.msra.mxu0 0.0
      %424 = vmatpush.msra.mxu0 0.0
      %425 = vmatpush.msra.mxu0 0.0
      %426 = vmatpush.msra.mxu0 0.0
      %427 = vmatpush.msra.mxu0 0.0
      %428 = vmatpush.msra.mxu0 %v399
      %429 = vmatmul.f32.gmra.mxu0 %v411
      %v430 = vpop.f32.mrf.mxu0
      %v431 = vadd.f32 0.0, %v430
      %432 = vdwg.mxu0
      %v433 = vrcp.pop %v409
      %v434 = vmul.f32 %v431, %v433
      %v435 = vmul.f32 %v434, %v434
      %v436 = vsel %vm154, %v435, 0.0
      %437 = vadd.xlane.f32.xlu0 %v436
      %v438 = vpop.xlane.xlu0 %437
      %v439 = vrot.slane %v438, 4
      %v440 = vadd.f32 %v438, %v439
      %v441 = vrot.slane %v440, 2
      %v442 = vadd.f32 %v440, %v441
      %v443 = vrot.slane %v442, 1
      %v444 = vadd.f32 %v442, %v443
      %v446 = vsel %vm154, %v434, 0
      %448 = vmatpush.msra.mxu0 0.0
      %449 = vmatpush.msra.mxu0 0.0
      %450 = vmatpush.msra.mxu0 0.0
      %451 = vmatpush.msra.mxu0 0.0
      %452 = vmatpush.msra.mxu0 0.0
      %453 = vmatpush.msra.mxu0 0.0
      %454 = vmatpush.msra.mxu0 0.0
      %455 = vmatpush.msra.mxu0 0.0
      %456 = vmatpush.msra.mxu0 0.0
      %457 = vmatpush.msra.mxu0 0.0
      %458 = vmatpush.msra.mxu0 0.0
      %459 = vmatpush.msra.mxu0 0.0
      %460 = vmatpush.msra.mxu0 0.0
      %461 = vmatpush.msra.mxu0 0.0
      %462 = vmatpush.msra.mxu0 0.0
      %463 = vmatpush.msra.mxu0 %v434
      %464 = vmatmul.f32.gmra.mxu0 %v446
      %v465 = vpop.f32.mrf.mxu0
      %v466 = vadd.f32 0.0, %v465
      %467 = vdwg.mxu0
      %v468 = vrcp.pop %v444
      %v469 = vmul.f32 %v466, %v468
      %v470 = vmul.f32 %v469, %v469
      %v471 = vsel %vm154, %v470, 0.0
      %472 = vadd.xlane.f32.xlu0 %v471
      %v473 = vpop.xlane.xlu0 %472
      %v474 = vrot.slane %v473, 4
      %v475 = vadd.f32 %v473, %v474
      %v476 = vrot.slane %v475, 2
      %v477 = vadd.f32 %v475, %v476
      %v478 = vrot.slane %v477, 1
      %v479 = vadd.f32 %v477, %v478
      %v481 = vsel %vm154, %v469, 0
      %483 = vmatpush.msra.mxu0 0.0
      %484 = vmatpush.msra.mxu0 0.0
      %485 = vmatpush.msra.mxu0 0.0
      %486 = vmatpush.msra.mxu0 0.0
      %487 = vmatpush.msra.mxu0 0.0
      %488 = vmatpush.msra.mxu0 0.0
      %489 = vmatpush.msra.mxu0 0.0
      %490 = vmatpush.msra.mxu0 0.0
      %491 = vmatpush.msra.mxu0 0.0
      %492 = vmatpush.msra.mxu0 0.0
      %493 = vmatpush.msra.mxu0 0.0
      %494 = vmatpush.msra.mxu0 0.0
      %495 = vmatpush.msra.mxu0 0.0
      %496 = vmatpush.msra.mxu0 0.0
      %497 = vmatpush.msra.mxu0 0.0
      %498 = vmatpush.msra.mxu0 %v469
      %499 = vmatmul.f32.gmra.mxu0 %v481
      %v500 = vpop.f32.mrf.mxu0
      %v501 = vadd.f32 0.0, %v500
      %502 = vdwg.mxu0
      %v503 = vrcp.pop %v479
      %v504 = vmul.f32 %v501, %v503
      %v505 = vmul.f32 %v504, %v504
      %v506 = vsel %vm154, %v505, 0.0
      %507 = vadd.xlane.f32.xlu0 %v506
      %v508 = vpop.xlane.xlu0 %507
      %v509 = vrot.slane %v508, 4
      %v510 = vadd.f32 %v508, %v509
      %v511 = vrot.slane %v510, 2
      %v512 = vadd.f32 %v510, %v511
      %v513 = vrot.slane %v512, 1
      %v514 = vadd.f32 %v512, %v513
      %v516 = vsel %vm154, %v504, 0
      %518 = vmatpush.msra.mxu0 0.0
      %519 = vmatpush.msra.mxu0 0.0
      %520 = vmatpush.msra.mxu0 0.0
      %521 = vmatpush.msra.mxu0 0.0
      %522 = vmatpush.msra.mxu0 0.0
      %523 = vmatpush.msra.mxu0 0.0
      %524 = vmatpush.msra.mxu0 0.0
      %525 = vmatpush.msra.mxu0 0.0
      %526 = vmatpush.msra.mxu0 0.0
      %527 = vmatpush.msra.mxu0 0.0
      %528 = vmatpush.msra.mxu0 0.0
      %529 = vmatpush.msra.mxu0 0.0
      %530 = vmatpush.msra.mxu0 0.0
      %531 = vmatpush.msra.mxu0 0.0
      %532 = vmatpush.msra.mxu0 0.0
      %533 = vmatpush.msra.mxu0 %v504
      %534 = vmatmul.f32.gmra.mxu0 %v516
      %v535 = vpop.f32.mrf.mxu0
      %v536 = vadd.f32 0.0, %v535
      %537 = vdwg.mxu0
      %v538 = vrcp.pop %v514
      %v539 = vmul.f32 %v536, %v538
      %v540 = vmul.f32 %v539, %v539
      %v541 = vsel %vm154, %v540, 0.0
      %542 = vadd.xlane.f32.xlu0 %v541
      %v543 = vpop.xlane.xlu0 %542
      %v544 = vrot.slane %v543, 4
      %v545 = vadd.f32 %v543, %v544
      %v546 = vrot.slane %v545, 2
      %v547 = vadd.f32 %v545, %v546
      %v548 = vrot.slane %v547, 1
      %v549 = vadd.f32 %v547, %v548
      %v551 = vsel %vm154, %v539, 0
      %553 = vmatpush.msra.mxu0 0.0
      %554 = vmatpush.msra.mxu0 0.0
      %555 = vmatpush.msra.mxu0 0.0
      %556 = vmatpush.msra.mxu0 0.0
      %557 = vmatpush.msra.mxu0 0.0
      %558 = vmatpush.msra.mxu0 0.0
      %559 = vmatpush.msra.mxu0 0.0
      %560 = vmatpush.msra.mxu0 0.0
      %561 = vmatpush.msra.mxu0 0.0
      %562 = vmatpush.msra.mxu0 0.0
      %563 = vmatpush.msra.mxu0 0.0
      %564 = vmatpush.msra.mxu0 0.0
      %565 = vmatpush.msra.mxu0 0.0
      %566 = vmatpush.msra.mxu0 0.0
      %567 = vmatpush.msra.mxu0 0.0
      %568 = vmatpush.msra.mxu0 %v539
      %569 = vmatmul.f32.gmra.mxu0 %v551
      %v570 = vpop.f32.mrf.mxu0
      %v571 = vadd.f32 0.0, %v570
      %572 = vdwg.mxu0
      %v573 = vrcp.pop %v549
      %v574 = vmul.f32 %v571, %v573
      %v575 = vmul.f32 %v574, %v574
      %v576 = vsel %vm154, %v575, 0.0
      %577 = vadd.xlane.f32.xlu0 %v576
      %v578 = vpop.xlane.xlu0 %577
      %v579 = vrot.slane %v578, 4
      %v580 = vadd.f32 %v578, %v579
      %v581 = vrot.slane %v580, 2
      %v582 = vadd.f32 %v580, %v581
      %v583 = vrot.slane %v582, 1
      %v584 = vadd.f32 %v582, %v583
      %v586 = vsel %vm154, %v574, 0
      %588 = vmatpush.msra.mxu0 0.0
      %589 = vmatpush.msra.mxu0 0.0
      %590 = vmatpush.msra.mxu0 0.0
      %591 = vmatpush.msra.mxu0 0.0
      %592 = vmatpush.msra.mxu0 0.0
      %593 = vmatpush.msra.mxu0 0.0
      %594 = vmatpush.msra.mxu0 0.0
      %595 = vmatpush.msra.mxu0 0.0
      %596 = vmatpush.msra.mxu0 0.0
      %597 = vmatpush.msra.mxu0 0.0
      %598 = vmatpush.msra.mxu0 0.0
      %599 = vmatpush.msra.mxu0 0.0
      %600 = vmatpush.msra.mxu0 0.0
      %601 = vmatpush.msra.mxu0 0.0
      %602 = vmatpush.msra.mxu0 0.0
      %603 = vmatpush.msra.mxu0 %v574
      %604 = vmatmul.f32.gmra.mxu0 %v586
      %v605 = vpop.f32.mrf.mxu0
      %v606 = vadd.f32 0.0, %v605
      %607 = vdwg.mxu0
      %v608 = vrcp.pop %v584
      %v609 = vmul.f32 %v606, %v608
      %v610 = vmul.f32 %v609, %v609
      %v611 = vsel %vm154, %v610, 0.0
      %612 = vadd.xlane.f32.xlu0 %v611
      %v613 = vpop.xlane.xlu0 %612
      %v614 = vrot.slane %v613, 4
      %v615 = vadd.f32 %v613, %v614
      %v616 = vrot.slane %v615, 2
      %v617 = vadd.f32 %v615, %v616
      %v618 = vrot.slane %v617, 1
      %v619 = vadd.f32 %v617, %v618
      %v621 = vsel %vm154, %v609, 0
      %623 = vmatpush.msra.mxu0 0.0
      %624 = vmatpush.msra.mxu0 0.0
      %625 = vmatpush.msra.mxu0 0.0
      %626 = vmatpush.msra.mxu0 0.0
      %627 = vmatpush.msra.mxu0 0.0
      %628 = vmatpush.msra.mxu0 0.0
      %629 = vmatpush.msra.mxu0 0.0
      %630 = vmatpush.msra.mxu0 0.0
      %631 = vmatpush.msra.mxu0 0.0
      %632 = vmatpush.msra.mxu0 0.0
      %633 = vmatpush.msra.mxu0 0.0
      %634 = vmatpush.msra.mxu0 0.0
      %635 = vmatpush.msra.mxu0 0.0
      %636 = vmatpush.msra.mxu0 0.0
      %637 = vmatpush.msra.mxu0 0.0
      %638 = vmatpush.msra.mxu0 %v609
      %639 = vmatmul.f32.gmra.mxu0 %v621
      %v640 = vpop.f32.mrf.mxu0
      %v641 = vadd.f32 0.0, %v640
      %642 = vdwg.mxu0
      %v643 = vrcp.pop %v619
      %v644 = vmul.f32 %v641, %v643
      %v645 = vmul.f32 %v644, %v43
      %v646 = vsel %vm154, %v645, 0.0
      %647 = vadd.xlane.f32.xlu0 %v646
      %v648 = vpop.xlane.xlu0 %647
      %v649 = vrot.slane %v648, 4
      %v650 = vadd.f32 %v648, %v649
      %v651 = vrot.slane %v650, 2
      %v652 = vadd.f32 %v650, %v651
      %v653 = vrot.slane %v652, 1
      %v654 = vadd.f32 %v652, %v653
      %v655 = vrcp.pop %v654
      %v656 = vmul.f32 %v654, %v655
      %v657 = vsub.f32 1.0, %v656
      %v658 = vmul.f32 %v655, %v657
      %v659 = vadd.f32 %v655, %v658
      %vm660 = vweird.f32 %v654
      %vm661 = vweird.f32 %v655
      %vm662 = vmor %vm660, %vm661
      %v663 = vsel %vm662, %v655, %v659
      %v664 = vand.u32 2147483647, %v654
      %vm665 = vcmp.eq.f32.partialorder %v664, 8.507059e+37
      %v666 = vand.u32 %v654, 2147483648
      %v667 = vor.u32 1.1754944e-38, %v666
      %v668 = vsel %vm665, %v667, %v663
      %v669 = vmul.f32 %v644, %v668
      %v671 = vsel %vm154, %v669, 0
      %673 = vmatpush.msra.mxu0 0.0
      %674 = vmatpush.msra.mxu0 0.0
      %675 = vmatpush.msra.mxu0 0.0
      %676 = vmatpush.msra.mxu0 0.0
      %677 = vmatpush.msra.mxu0 0.0
      %678 = vmatpush.msra.mxu0 0.0
      %679 = vmatpush.msra.mxu0 0.0
      %680 = vmatpush.msra.mxu0 0.0
      %681 = vmatpush.msra.mxu0 0.0
      %682 = vmatpush.msra.mxu0 0.0
      %683 = vmatpush.msra.mxu0 0.0
      %684 = vmatpush.msra.mxu0 0.0
      %685 = vmatpush.msra.mxu0 0.0
      %686 = vmatpush.msra.mxu0 0.0
      %687 = vmatpush.msra.mxu0 0.0
      %688 = vmatpush.msra.mxu0 %v36
      %689 = vmatmul.f32.gmra.mxu0 %v671
      %v690 = vpop.f32.mrf.mxu0
      %v691 = vadd.f32 0.0, %v690
      %692 = vdwg.mxu0
      %693 = vmatpush.msra.mxu0 0.0
      %694 = vmatpush.msra.mxu0 0.0
      %695 = vmatpush.msra.mxu0 0.0
      %696 = vmatpush.msra.mxu0 0.0
      %697 = vmatpush.msra.mxu0 0.0
      %698 = vmatpush.msra.mxu0 0.0
      %699 = vmatpush.msra.mxu0 0.0
      %700 = vmatpush.msra.mxu0 0.0
      %701 = vmatpush.msra.mxu0 0.0
      %702 = vmatpush.msra.mxu0 0.0
      %703 = vmatpush.msra.mxu0 0.0
      %704 = vmatpush.msra.mxu0 0.0
      %705 = vmatpush.msra.mxu0 0.0
      %706 = vmatpush.msra.mxu0 0.0
      %707 = vmatpush.msra.mxu0 0.0
      %708 = vmatpush.msra.mxu0 %v691
      %709 = vmatmul.f32.gmra.mxu0 %v179
      %v710 = vpop.f32.mrf.mxu0
      %v711 = vadd.f32 0.0, %v710
      %712 = vdwg.mxu0
      %v713 = vadd.f32 %v153, %v35
      %v714 = vmul.f32 %v713, %v711
      %v715 = vsel %vm154, %v714, 0.0
      %716 = vadd.xlane.f32.xlu0 %v715
      %v717 = vpop.xlane.xlu0 %716
      %v718 = vrot.slane %v717, 4
      %v719 = vadd.f32 %v717, %v718
      %v720 = vrot.slane %v719, 2
      %v721 = vadd.f32 %v719, %v720
      %v722 = vrot.slane %v721, 1
      %v723 = vadd.f32 %v721, %v722
      %v725 = vsel %vm154, %v711, 0
      %727 = vmatpush.msra.mxu0 0.0
      %728 = vmatpush.msra.mxu0 0.0
      %729 = vmatpush.msra.mxu0 0.0
      %730 = vmatpush.msra.mxu0 0.0
      %731 = vmatpush.msra.mxu0 0.0
      %732 = vmatpush.msra.mxu0 0.0
      %733 = vmatpush.msra.mxu0 0.0
      %734 = vmatpush.msra.mxu0 0.0
      %735 = vmatpush.msra.mxu0 0.0
      %736 = vmatpush.msra.mxu0 0.0
      %737 = vmatpush.msra.mxu0 0.0
      %738 = vmatpush.msra.mxu0 0.0
      %739 = vmatpush.msra.mxu0 0.0
      %740 = vmatpush.msra.mxu0 0.0
      %741 = vmatpush.msra.mxu0 0.0
      %742 = vmatpush.msra.mxu0 %v51
      %743 = vmatmul.f32.gmra.mxu0 %v725
      %v744 = vpop.f32.mrf.mxu0
      %v745 = vadd.f32 0.0, %v744
      %746 = vdwg.mxu0
      %v747 = vmul.f32 %v47, %v745
      %v749 = vsel %vm154, 1.0, 0
      %751 = vmatpush.msra.mxu0 0.0
      %752 = vmatpush.msra.mxu0 0.0
      %753 = vmatpush.msra.mxu0 0.0
      %754 = vmatpush.msra.mxu0 0.0
      %755 = vmatpush.msra.mxu0 0.0
      %756 = vmatpush.msra.mxu0 0.0
      %757 = vmatpush.msra.mxu0 0.0
      %758 = vmatpush.msra.mxu0 0.0
      %759 = vmatpush.msra.mxu0 0.0
      %760 = vmatpush.msra.mxu0 0.0
      %761 = vmatpush.msra.mxu0 0.0
      %762 = vmatpush.msra.mxu0 0.0
      %763 = vmatpush.msra.mxu0 0.0
      %764 = vmatpush.msra.mxu0 0.0
      %765 = vmatpush.msra.mxu0 0.0
      %766 = vmatpush.msra.mxu0 %v747
      %767 = vmatmul.f32.gmra.mxu0 %v749
      %v768 = vpop.f32.mrf.mxu0
      %v769 = vadd.f32 0.0, %v768
      %770 = vdwg.mxu0
    $region18: #{_scf_pallas.1} parent=1 // loop_footer
      %s96 = sadd.s32 1, %s92
    $region19: #{_scf_pallas.1} parent=1 // loop_footer_branch
      %91 = sbr.rel target = $region15
    $region20: #{_scf_pallas.1} parent=1 // loop_exit
      _
    %v771 = vadd.f32 %v98, 0.0
    %772 = vst [vmem:[%s2] sm:$0xff] %v771
    // Predicated region
    $region21: #{_scf_pallas.1} parent=1 // pred_check
      _
    $region22: #{_scf_pallas.1} parent=1 // pred_check_branch
      %774 = sbr.rel (0) target = $region24
    $region23: #{_scf_pallas.1} parent=1 // pred_region
      _
    $region24: #{_scf_pallas.1} parent=1 // pred_fallthru
      _
    // Predicated region
    $region25: #{_scf_pallas.1} parent=1 // pred_check
      _
    $region26: #{_scf_pallas.1} parent=1 // pred_check_branch
      %776 = sbr.rel (0) target = $region28
    $region27: #{_scf_pallas.1} parent=1 // pred_region
      _
    $region28: #{_scf_pallas.1} parent=1 // pred_fallthru
      _
    %777 = vsyncpa [#allocation3], 1

</llo_original>
